<compile_context>
chip_gen: v5e
topology: v5e:2x2
jax: 0.10.0
libtpu: 0.0.40
codegen_flags: <defaults>
</compile_context>

<pallas_src>
import jax
import jax.numpy as jnp
from jax.experimental import pallas as pl
from jax.experimental.pallas import tpu as pltpu


def critic_kernel(state_ref, action_ref, w1s_ref, w1a_ref, b1_ref,
                  w2_ref, b2_ref, w3_ref, b3_ref, o_ref):
    cdt = w1s_ref.dtype  # MXU compute dtype (f32 or bf16); accumulation is f32

    s = state_ref[...].astype(cdt)                    # (bb, S)
    a = action_ref[...].astype(cdt)                   # (bb, A)

    # fc1: fused concat  ->  state @ W1_s + action @ W1_a + b1, ReLU in f32.
    h1 = (jnp.dot(s, w1s_ref[...], preferred_element_type=jnp.float32)
          + jnp.dot(a, w1a_ref[...], preferred_element_type=jnp.float32)
          + b1_ref[...])
    h1 = jnp.maximum(h1, 0.0)

    # fc2
    h2 = jnp.dot(h1.astype(cdt), w2_ref[...],
                 preferred_element_type=jnp.float32) + b2_ref[...]
    h2 = jnp.maximum(h2, 0.0)

    # fc3 (out_features == 1): VPU multiply + lane reduction instead of an
    # N=1 MXU pass. Result is written lane-major -> (1, bb) lane-dense store.
    w3_row = w3_ref[...].astype(jnp.float32)          # (1, H)
    q = jnp.sum(h2 * w3_row, axis=-1) + b3_ref[0, 0]  # (bb,) f32
    o_ref[...] = q[None, :].astype(o_ref.dtype)       # (1, bb)


def _round_up(x, m):
    return ((x + m - 1) // m) * m


def critic_forward(state, action, params, *, block_b=2048):
    """state: (B, state_dim), action: (B, action_dim) -> q: (B, 1) float32.

    Inputs are consumed in their native dtype (cast to the weight dtype inside
    the kernel); pass bf16 state/action on v6e/v7x to halve input DMA bytes.
    """
    w1_s, w1_a, b1, w2, b2, w3, b3 = params
    B, state_dim = state.shape
    action_dim = action.shape[1]
    hidden_dim = w2.shape[0]

    # ---- batch tile selection -------------------------------------------
    # * B > block_b : fixed big tile (multiple of 128 -> aligned sublanes and
    #   lane-dense output stores), ragged last tile is masked.
    # * 256 <= B <= block_b : split into >= 2 tiles so both v7x TCs get work.
    # * small B : one full-batch tile (block == full array dims, always legal).
    if B > block_b:
        bb = _round_up(block_b, 128)
    elif B >= 256:
        bb = _round_up(pl.cdiv(B, 2), 128)
        if bb >= B:
            bb = B
    else:
        bb = B
    num_tiles = pl.cdiv(B, bb)
    grid = (num_tiles,)

    # ---- VMEM budget (double-buffered acts/out + resident weights + temps) --
    in_bytes = max(state.dtype.itemsize, action.dtype.itemsize)
    w_bytes = w1_s.dtype.itemsize
    weight_elems = ((state_dim + action_dim) * hidden_dim
                    + hidden_dim * hidden_dim + 3 * hidden_dim)
    vmem_est = (2 * weight_elems * w_bytes                      # weight buffers
                + 2 * bb * (state_dim + action_dim) * in_bytes  # input buffers
                + 2 * bb * 4                                    # output buffers
                + 4 * bb * hidden_dim * 4)                      # h1/h2/q temps
    # 2x headroom, floor at 16 MiB, cap at 48 MiB so it also fits v7x (64 MiB).
    vmem_limit = int(min(max(2 * vmem_est, 16 << 20), 48 << 20))

    def batch_spec(feat):
        return pl.BlockSpec((bb, feat), lambda i: (i, 0))

    def const_spec(shape):
        # Grid-invariant block: same index every step -> weights stay resident
        # in VMEM and are not re-DMA'd per batch tile.
        return pl.BlockSpec(shape, lambda i: tuple(0 for _ in shape))

    q_slab = pl.pallas_call(
        critic_kernel,
        out_shape=jax.ShapeDtypeStruct((num_tiles, bb), jnp.float32),
        grid=grid,
        in_specs=[
            batch_spec(state_dim),                 # state  (pipelined)
            batch_spec(action_dim),                # action (pipelined)
            const_spec(w1_s.shape),                # fc1 weight (state half)
            const_spec(w1_a.shape),                # fc1 weight (action half)
            const_spec(b1.shape),                  # fc1 bias (1, H)
            const_spec(w2.shape),                  # fc2 weight
            const_spec(b2.shape),                  # fc2 bias (1, H)
            const_spec(w3.shape),                  # fc3 weight as (1, H) row
            pl.BlockSpec((1, 1), lambda i: (0, 0),
                         memory_space=pltpu.MemorySpace.SMEM),  # fc3 bias scalar
        ],
        out_specs=pl.BlockSpec((1, bb), lambda i: (i, 0)),      # lane-dense slab
        compiler_params=pltpu.CompilerParams(
            dimension_semantics=("parallel",),     # megacore split on v7x
            vmem_limit_bytes=vmem_limit),
    )(state, action, w1_s, w1_a, b1, w2, b2, w3, b3)

    # (num_tiles, bb) lane-dense slab -> (B, 1); garbage rows from the ragged
    # last tile are sliced off (no cross-row coupling in the kernel).
    return q_slab.reshape(num_tiles * bb, 1)[:B]


def init_critic_params(key, state_dim, action_dim, hidden_dim, *,
                       param_dtype=jnp.float32):
    """torch.nn.Linear-style init; weights stored [in, out]; fc1 pre-split;
    fc3 stored as a (1, hidden) row; biases always float32."""
    k1, k2, k3, k4, k5, k6 = jax.random.split(key, 6)

    def uniform(k, shape, fan_in):
        bound = 1.0 / (fan_in ** 0.5)
        return jax.random.uniform(k, shape, jnp.float32, -bound, bound)

    fan1 = state_dim + action_dim
    w1 = uniform(k1, (fan1, hidden_dim), fan1)
    b1 = uniform(k2, (1, hidden_dim), fan1)
    w2 = uniform(k3, (hidden_dim, hidden_dim), hidden_dim)
    b2 = uniform(k4, (1, hidden_dim), hidden_dim)
    w3 = uniform(k5, (hidden_dim, 1), hidden_dim)
    b3 = uniform(k6, (1, 1), hidden_dim)

    w1_s, w1_a = w1[:state_dim], w1[state_dim:]
    w3_row = w3.T                                   # (1, hidden_dim)

    cast = lambda w: w.astype(param_dtype)
    return (cast(w1_s), cast(w1_a), b1, cast(w2), b2, cast(w3_row), b3)


def critic_reference(state, action, params):
    """Pure-JAX reference of the same math (same dtype path as the kernel)."""
    w1_s, w1_a, b1, w2, b2, w3, b3 = params
    cdt = w1_s.dtype
    x = jnp.concatenate([state, action], axis=-1)
    w1 = jnp.concatenate([w1_s, w1_a], axis=0)
    h = jnp.maximum(jnp.dot(x.astype(cdt), w1,
                            preferred_element_type=jnp.float32) + b1, 0.0)
    h = jnp.maximum(jnp.dot(h.astype(cdt), w2,
                            preferred_element_type=jnp.float32) + b2, 0.0)
    q = h @ w3.astype(jnp.float32).T + b3           # fc3 in f32, as in the kernel
    return q


if __name__ == "__main__":
    state_dim, action_dim, hidden_dim = 8, 4, 32

    key = jax.random.PRNGKey(0)
    k_params, k_s1, k_a1, k_s2, k_a2 = jax.random.split(key, 5)

    # --- 1) small batch, float32 weights/inputs, single tile ------------------
    params_f32 = init_critic_params(k_params, state_dim, action_dim, hidden_dim)
    state = jax.random.normal(k_s1, (8, state_dim), jnp.float32)
    action = jax.random.normal(k_a1, (8, action_dim), jnp.float32)

    q = critic_forward(state, action, params_f32)
    jax.block_until_ready(q)
    q_ref = critic_reference(state, action, params_f32)
    assert q.shape == (8, 1)
    assert jnp.allclose(q, q_ref, atol=1e-5, rtol=1e-5)

    # --- 2) larger ragged batch, bf16 weights AND bf16 inputs (no wrapper
    #        upcast); exercises the 2-tile split + lane-dense output path. -----
    params_bf16 = init_critic_params(k_params, state_dim, action_dim, hidden_dim,
                                     param_dtype=jnp.bfloat16)
    state2 = jax.random.normal(k_s2, (1000, state_dim),
                               jnp.float32).astype(jnp.bfloat16)
    action2 = jax.random.normal(k_a2, (1000, action_dim),
                                jnp.float32).astype(jnp.bfloat16)

    q2 = critic_forward(state2, action2, params_bf16)
    jax.block_until_ready(q2)
    q2_ref = critic_reference(state2, action2, params_bf16)
    assert q2.shape == (1000, 1)
    assert jnp.allclose(q2, q2_ref, atol=2e-2, rtol=2e-2)

    print("KERNEL_OK")
</pallas_src>

<mosaic_0001>
module attributes {stable_mosaic.version = 11 : i64} {
  func.func @critic_kernel(%arg0: i32, %arg1: memref<8x8xf32, #tpu.memory_space<vmem>>, %arg2: memref<8x4xf32, #tpu.memory_space<vmem>>, %arg3: memref<8x32xf32, #tpu.memory_space<vmem>>, %arg4: memref<4x32xf32, #tpu.memory_space<vmem>>, %arg5: memref<1x32xf32, #tpu.memory_space<vmem>>, %arg6: memref<32x32xf32, #tpu.memory_space<vmem>>, %arg7: memref<1x32xf32, #tpu.memory_space<vmem>>, %arg8: memref<1x32xf32, #tpu.memory_space<vmem>>, %arg9: memref<1x1xf32, #tpu.memory_space<smem>>, %arg10: memref<1x8xf32, #tpu.memory_space<vmem>>) attributes {dimension_semantics = [#tpu.dimension_semantics<parallel>], iteration_bounds = array<i64: 1>, scalar_prefetch = 0 : i64, scratch_operands = 0 : i64, tpu.core_type = #tpu.core_type<tc>, window_params = [{transform_indices = @transform_0, window_bounds = array<i64: 8, 8>}, {transform_indices = @transform_1, window_bounds = array<i64: 8, 4>}, {pipeline_mode = #tpu.pipeline_mode<synchronous>, transform_indices = @transform_2, window_bounds = array<i64: 8, 32>}, {pipeline_mode = #tpu.pipeline_mode<synchronous>, transform_indices = @transform_3, window_bounds = array<i64: 4, 32>}, {pipeline_mode = #tpu.pipeline_mode<synchronous>, transform_indices = @transform_4, window_bounds = array<i64: 1, 32>}, {pipeline_mode = #tpu.pipeline_mode<synchronous>, transform_indices = @transform_5, window_bounds = array<i64: 32, 32>}, {pipeline_mode = #tpu.pipeline_mode<synchronous>, transform_indices = @transform_6, window_bounds = array<i64: 1, 32>}, {pipeline_mode = #tpu.pipeline_mode<synchronous>, transform_indices = @transform_7, window_bounds = array<i64: 1, 32>}, {transform_indices = @transform_8, window_bounds = array<i64: 1, 1>}, {transform_indices = @transform_9, window_bounds = array<i64: 1, 8>}]} {
    %c0 = arith.constant 0 : index
    %c0_0 = arith.constant 0 : index
    %0 = vector.load %arg1[%c0, %c0_0] : memref<8x8xf32, #tpu.memory_space<vmem>>, vector<8x8xf32>
    %c0_1 = arith.constant 0 : index
    %c0_2 = arith.constant 0 : index
    %1 = vector.load %arg2[%c0_1, %c0_2] : memref<8x4xf32, #tpu.memory_space<vmem>>, vector<8x4xf32>
    %c0_3 = arith.constant 0 : index
    %c0_4 = arith.constant 0 : index
    %2 = vector.load %arg3[%c0_3, %c0_4] : memref<8x32xf32, #tpu.memory_space<vmem>>, vector<8x32xf32>
    %cst = arith.constant dense<0.000000e+00> : vector<8x32xf32>
    %3 = tpu.matmul %0, %2, %cst {dimension_numbers = #tpu.dot_dimension_numbers<[1], [0], [0], [1], [0, 0, 1, 1], [], []>} : vector<8x8xf32>, vector<8x32xf32>, vector<8x32xf32> -> vector<8x32xf32>
    %c0_5 = arith.constant 0 : index
    %c0_6 = arith.constant 0 : index
    %4 = vector.load %arg4[%c0_5, %c0_6] : memref<4x32xf32, #tpu.memory_space<vmem>>, vector<4x32xf32>
    %cst_7 = arith.constant dense<0.000000e+00> : vector<8x32xf32>
    %5 = tpu.matmul %1, %4, %cst_7 {dimension_numbers = #tpu.dot_dimension_numbers<[1], [0], [0], [1], [0, 0, 1, 1], [], []>} : vector<8x4xf32>, vector<4x32xf32>, vector<8x32xf32> -> vector<8x32xf32>
    %6 = arith.addf %3, %5 : vector<8x32xf32>
    %c0_8 = arith.constant 0 : index
    %c0_9 = arith.constant 0 : index
    %7 = vector.load %arg5[%c0_8, %c0_9] : memref<1x32xf32, #tpu.memory_space<vmem>>, vector<1x32xf32>
    %8 = vector.broadcast %7 : vector<1x32xf32> to vector<8x32xf32>
    %9 = arith.addf %6, %8 : vector<8x32xf32>
    %cst_10 = arith.constant 0.000000e+00 : f32
    %10 = vector.broadcast %cst_10 : f32 to vector<8x32xf32>
    %11 = arith.maximumf %9, %10 : vector<8x32xf32>
    %c0_11 = arith.constant 0 : index
    %c0_12 = arith.constant 0 : index
    %12 = vector.load %arg6[%c0_11, %c0_12] : memref<32x32xf32, #tpu.memory_space<vmem>>, vector<32x32xf32>
    %cst_13 = arith.constant dense<0.000000e+00> : vector<8x32xf32>
    %13 = tpu.matmul %11, %12, %cst_13 {dimension_numbers = #tpu.dot_dimension_numbers<[1], [0], [0], [1], [0, 0, 1, 1], [], []>} : vector<8x32xf32>, vector<32x32xf32>, vector<8x32xf32> -> vector<8x32xf32>
    %c0_14 = arith.constant 0 : index
    %c0_15 = arith.constant 0 : index
    %14 = vector.load %arg7[%c0_14, %c0_15] : memref<1x32xf32, #tpu.memory_space<vmem>>, vector<1x32xf32>
    %15 = vector.broadcast %14 : vector<1x32xf32> to vector<8x32xf32>
    %16 = arith.addf %13, %15 : vector<8x32xf32>
    %cst_16 = arith.constant 0.000000e+00 : f32
    %17 = vector.broadcast %cst_16 : f32 to vector<8x32xf32>
    %18 = arith.maximumf %16, %17 : vector<8x32xf32>
    %c0_17 = arith.constant 0 : index
    %c0_18 = arith.constant 0 : index
    %19 = vector.load %arg8[%c0_17, %c0_18] : memref<1x32xf32, #tpu.memory_space<vmem>>, vector<1x32xf32>
    %20 = vector.broadcast %19 : vector<1x32xf32> to vector<8x32xf32>
    %21 = arith.mulf %18, %20 : vector<8x32xf32>
    %cst_19 = arith.constant dense<0.000000e+00> : vector<8xf32>
    %22 = vector.multi_reduction <add>, %21, %cst_19 [1] : vector<8x32xf32> to vector<8xf32>
    %c0_20 = arith.constant 0 : index
    %c0_21 = arith.constant 0 : index
    %23 = memref.load %arg9[%c0_20, %c0_21] : memref<1x1xf32, #tpu.memory_space<smem>>
    %24 = vector.broadcast %23 : f32 to vector<8xf32>
    %25 = arith.addf %22, %24 : vector<8xf32>
    %26 = vector.shape_cast %25 : vector<8xf32> to vector<1x8xf32>
    %c0_22 = arith.constant 0 : index
    %c0_23 = arith.constant 0 : index
    %27 = vector.load %arg10[%c0_22, %c0_23] : memref<1x8xf32, #tpu.memory_space<vmem>>, vector<1x8xf32>
    tpu.vector_store %arg10[%c0_22, %c0_23], %26 {strides = array<i32>} : memref<1x8xf32, #tpu.memory_space<vmem>>, vector<1x8xf32>,
    return
  }
  func.func @transform_0(%arg0: i32) -> (i32, i32) {
    %c0_i32 = arith.constant 0 : i32
    %c0_i32_0 = arith.constant 0 : i32
    return %arg0, %c0_i32 : i32, i32
  }
  func.func @transform_1(%arg0: i32) -> (i32, i32) {
    %c0_i32 = arith.constant 0 : i32
    %c0_i32_0 = arith.constant 0 : i32
    return %arg0, %c0_i32 : i32, i32
  }
  func.func @transform_2(%arg0: i32) -> (i32, i32) {
    %c0_i32 = arith.constant 0 : i32
    %c0_i32_0 = arith.constant 0 : i32
    %c0_i32_1 = arith.constant 0 : i32
    return %c0_i32, %c0_i32_0 : i32, i32
  }
  func.func @transform_3(%arg0: i32) -> (i32, i32) {
    %c0_i32 = arith.constant 0 : i32
    %c0_i32_0 = arith.constant 0 : i32
    %c0_i32_1 = arith.constant 0 : i32
    return %c0_i32, %c0_i32_0 : i32, i32
  }
  func.func @transform_4(%arg0: i32) -> (i32, i32) {
    %c0_i32 = arith.constant 0 : i32
    %c0_i32_0 = arith.constant 0 : i32
    %c0_i32_1 = arith.constant 0 : i32
    return %c0_i32, %c0_i32_0 : i32, i32
  }
  func.func @transform_5(%arg0: i32) -> (i32, i32) {
    %c0_i32 = arith.constant 0 : i32
    %c0_i32_0 = arith.constant 0 : i32
    %c0_i32_1 = arith.constant 0 : i32
    return %c0_i32, %c0_i32_0 : i32, i32
  }
  func.func @transform_6(%arg0: i32) -> (i32, i32) {
    %c0_i32 = arith.constant 0 : i32
    %c0_i32_0 = arith.constant 0 : i32
    %c0_i32_1 = arith.constant 0 : i32
    return %c0_i32, %c0_i32_0 : i32, i32
  }
  func.func @transform_7(%arg0: i32) -> (i32, i32) {
    %c0_i32 = arith.constant 0 : i32
    %c0_i32_0 = arith.constant 0 : i32
    %c0_i32_1 = arith.constant 0 : i32
    return %c0_i32, %c0_i32_0 : i32, i32
  }
  func.func @transform_8(%arg0: i32) -> (i32, i32) {
    %c0_i32 = arith.constant 0 : i32
    %c0_i32_0 = arith.constant 0 : i32
    %c0_i32_1 = arith.constant 0 : i32
    return %c0_i32, %c0_i32_0 : i32, i32
  }
  func.func @transform_9(%arg0: i32) -> (i32, i32) {
    %c0_i32 = arith.constant 0 : i32
    %c0_i32_0 = arith.constant 0 : i32
    return %arg0, %c0_i32 : i32, i32
  }
}

</mosaic_0001>

<llo_original>
// kernel: tpu_custom_call.1
$region0: #{tpu_custom_call.1}
  #allocation0 [shape = 'u32[]', space=smem, size = 0x4, offset = 0x4, fixed_abs, tag = 'smem constant byte address 0x4 - core index']
  #allocation1 [shape = 'u32[72,128]{1,0:T(1,128)}', space=vmem, size = 0x9000, scoped, tag = 'internal scratch']
  #allocation2 [shape = 'f32[1,1]{1,0:T(1,128)S(6)}', space=smem, size = 0x200, scoped, tag = 'scoped memory for tpu_custom_call.1']
  %s0 = inlined_call_operand.vmem [shape: f32[8,8], index: 0, kind: input, shape index: {}]
  %s1 = inlined_call_operand.vmem [shape: f32[8,4], index: 1, kind: input, shape index: {}]
  %s2 = inlined_call_operand.hbm [shape: f32[8,32], index: 2, kind: input, shape index: {}]
  %s3 = inlined_call_operand.vmem [shape: f32[4,32], index: 3, kind: input, shape index: {}]
  %s4 = inlined_call_operand.vmem [shape: f32[1,32], index: 4, kind: input, shape index: {}]
  %s5 = inlined_call_operand.hbm [shape: f32[32,32], index: 5, kind: input, shape index: {}]
  %s6 = inlined_call_operand.vmem [shape: f32[1,32], index: 6, kind: input, shape index: {}]
  %s7 = inlined_call_operand.vmem [shape: f32[1,32], index: 7, kind: input, shape index: {}]
  %s8 = inlined_call_operand.<no memory space> [shape: f32[1,1], index: 8, kind: input, shape index: {}]
  %s9 = inlined_call_operand.hbm [shape: f32[1,8], index: 9, kind: output, shape index: {}]
  %s10 = sld [smem:[#allocation0]]
  $region54: #{tpu_custom_call.1} parent=0
    _
  %s12 = ssub.s32 1, %s10
  %s13 = scalar_select 0, %s12, %s10
  %14 = sst [smem:[#allocation2]] %s8
  $region1: #{tpu_custom_call.1} parent=0
    #allocation3 [shape = 'u8[4096]{0}', space=vmem, size = 0x1000, scoped, tag = 'input window, operand 2, single buffered']
    #allocation4 [shape = 's32[1]{0}', space=sflag, size = 0x4, scoped, tag = 'scoped memory for tpu_custom_call.1']
    #allocation5 [shape = 's32[1]{0}', space=sflag, size = 0x4, scoped, tag = 'scoped memory for tpu_custom_call.1']
    #allocation6 [shape = 'u8[16384]{0}', space=vmem, size = 0x4000, scoped, tag = 'input window, operand 5, single buffered']
    #allocation7 [shape = 's32[1]{0}', space=sflag, size = 0x4, scoped, tag = 'scoped memory for tpu_custom_call.1']
    #allocation8 [shape = 'u8[512]{0}', space=vmem, size = 0x400, scoped, tag = 'output window, operand 0, single buffered']
    %15 = vsyncpa [#allocation4], 0
    %16 = vsyncpa [#allocation7], 0
    %17 = vsyncpa [#allocation5], 0
    // Predicated region
    $region2: #{tpu_custom_call.1} parent=1 // pred_check
      _
    $region3: #{tpu_custom_call.1} parent=1 // pred_check_branch
      %19 = sbr.rel (0) target = $region5
    $region4: #{tpu_custom_call.1} parent=1 // pred_region
      _
    $region5: #{tpu_custom_call.1} parent=1 // pred_fallthru
      _
    // Predicated region
    $region6: #{tpu_custom_call.1} parent=1 // pred_check
      _
    $region7: #{tpu_custom_call.1} parent=1 // pred_check_branch
      %21 = sbr.rel (0) target = $region9
    $region8: #{tpu_custom_call.1} parent=1 // pred_region
      _
    $region9: #{tpu_custom_call.1} parent=1 // pred_fallthru
      _
    // Predicated region
    $region10: #{tpu_custom_call.1} parent=1 // pred_check
      _
    $region11: #{tpu_custom_call.1} parent=1 // pred_check_branch
      %23 = sbr.rel (0) target = $region13
    $region12: #{tpu_custom_call.1} parent=1 // pred_region
      %25 = vsyncadd [#allocation4], 0
      %s27 = sshll.u32 %s2, 4
      %s28 = int_to_ptr.hbm [resolvable:$true] %s27
      %s29 = sshll.u32 [#allocation3], 4
      %s30 = int_to_ptr.vmem [resolvable:$true] %s29
      %32 = dma.hbm_to_vmem [thread:$0]  %s28, 128, %s30, [#allocation4]
    $region13: #{tpu_custom_call.1} parent=1 // pred_fallthru
      _
    // Predicated region
    $region14: #{tpu_custom_call.1} parent=1 // pred_check
      _
    $region15: #{tpu_custom_call.1} parent=1 // pred_check_branch
      %34 = sbr.rel (0) target = $region17
    $region16: #{tpu_custom_call.1} parent=1 // pred_region
      _
    $region17: #{tpu_custom_call.1} parent=1 // pred_fallthru
      _
    // Predicated region
    $region18: #{tpu_custom_call.1} parent=1 // pred_check
      _
    $region19: #{tpu_custom_call.1} parent=1 // pred_check_branch
      %36 = sbr.rel (0) target = $region21
    $region20: #{tpu_custom_call.1} parent=1 // pred_region
      _
    $region21: #{tpu_custom_call.1} parent=1 // pred_fallthru
      _
    // Predicated region
    $region22: #{tpu_custom_call.1} parent=1 // pred_check
      _
    $region23: #{tpu_custom_call.1} parent=1 // pred_check_branch
      %38 = sbr.rel (0) target = $region25
    $region24: #{tpu_custom_call.1} parent=1 // pred_region
      %40 = vsyncadd [#allocation7], 0
      %s41 = sshll.u32 %s5, 4
      %s42 = int_to_ptr.hbm [resolvable:$true] %s41
      %s43 = sshll.u32 [#allocation6], 4
      %s44 = int_to_ptr.vmem [resolvable:$true] %s43
      %49 = dma.hbm_to_vmem [thread:$0]  %s42, 512, %s44, [#allocation7], 128, 128, 8
    $region25: #{tpu_custom_call.1} parent=1 // pred_fallthru
      _
    // Predicated region
    $region26: #{tpu_custom_call.1} parent=1 // pred_check
      _
    $region27: #{tpu_custom_call.1} parent=1 // pred_check_branch
      %51 = sbr.rel (0) target = $region29
    $region28: #{tpu_custom_call.1} parent=1 // pred_region
      _
    $region29: #{tpu_custom_call.1} parent=1 // pred_fallthru
      _
    // Predicated region
    $region30: #{tpu_custom_call.1} parent=1 // pred_check
      _
    $region31: #{tpu_custom_call.1} parent=1 // pred_check_branch
      %53 = sbr.rel (0) target = $region33
    $region32: #{tpu_custom_call.1} parent=1 // pred_region
      _
    $region33: #{tpu_custom_call.1} parent=1 // pred_fallthru
      _
    // Predicated region
    $region34: #{tpu_custom_call.1} parent=1 // pred_check
      _
    $region35: #{tpu_custom_call.1} parent=1 // pred_check_branch
      %55 = sbr.rel (0) target = $region37
    $region36: #{tpu_custom_call.1} parent=1 // pred_region
      _
    $region37: #{tpu_custom_call.1} parent=1 // pred_fallthru
      _
    // Predicated region
    $region38: #{tpu_custom_call.1} parent=1 // pred_check
      _
    $region39: #{tpu_custom_call.1} parent=1 // pred_check_branch
      %57 = sbr.rel (0) target = $region41
    $region40: #{tpu_custom_call.1} parent=1 // pred_region
      %59 = dma.done [#allocation4], 128
    $region41: #{tpu_custom_call.1} parent=1 // pred_fallthru
      _
    // Predicated region
    $region42: #{tpu_custom_call.1} parent=1 // pred_check
      _
    $region43: #{tpu_custom_call.1} parent=1 // pred_check_branch
      %61 = sbr.rel (0) target = $region45
    $region44: #{tpu_custom_call.1} parent=1 // pred_region
      %63 = dma.done [#allocation7], 512
    $region45: #{tpu_custom_call.1} parent=1 // pred_fallthru
      _
    %v64 = vld [vmem:[%s0] sm:$0xff]
    %v65 = vld [vmem:[%s1] sm:$0xff]
    %v66 = vld [vmem:[#allocation3] sm:$0xff]
    %v67 = vld [vmem:[%s3] sm:$0xf]
    %vm68 = vcmask 31744
    %v70 = vsel %vm68, %v65, 0
    %vm72 = vcmask 1043456
    %v74 = vsel %vm72, %v67, 0
    %76 = vmatpush.msra.mxu0 0.0
    %77 = vmatpush.msra.mxu0 0.0
    %78 = vmatpush.msra.mxu0 0.0
    %79 = vmatpush.msra.mxu0 0.0
    %80 = vmatpush.msra.mxu0 0.0
    %81 = vmatpush.msra.mxu0 0.0
    %82 = vmatpush.msra.mxu0 0.0
    %83 = vmatpush.msra.mxu0 0.0
    %84 = vmatpush.msra.mxu0 0.0
    %85 = vmatpush.msra.mxu0 0.0
    %86 = vmatpush.msra.mxu0 0.0
    %87 = vmatpush.msra.mxu0 0.0
    %88 = vmatpush.msra.mxu0 0.0
    %89 = vmatpush.msra.mxu0 0.0
    %90 = vmatpush.msra.mxu0 0.0
    %91 = vmatpush.msra.mxu0 %v74
    %92 = vmatmul.f32.gmra.mxu0 %v70
    %v93 = vpop.f32.mrf.mxu0
    %v94 = vadd.f32 0.0, %v93
    %95 = vdwg.mxu0
    %vm96 = vcmask 64512
    %v98 = vsel %vm96, %v64, 0
    %100 = vmatpush.msra.mxu0 0.0
    %101 = vmatpush.msra.mxu0 0.0
    %102 = vmatpush.msra.mxu0 0.0
    %103 = vmatpush.msra.mxu0 0.0
    %104 = vmatpush.msra.mxu0 0.0
    %105 = vmatpush.msra.mxu0 0.0
    %106 = vmatpush.msra.mxu0 0.0
    %107 = vmatpush.msra.mxu0 0.0
    %108 = vmatpush.msra.mxu0 0.0
    %109 = vmatpush.msra.mxu0 0.0
    %110 = vmatpush.msra.mxu0 0.0
    %111 = vmatpush.msra.mxu0 0.0
    %112 = vmatpush.msra.mxu0 0.0
    %113 = vmatpush.msra.mxu0 0.0
    %114 = vmatpush.msra.mxu0 0.0
    %115 = vmatpush.msra.mxu0 %v66
    %116 = vmatmul.f32.gmra.mxu0 %v98
    %v117 = vpop.f32.mrf.mxu0
    %v118 = vadd.f32 %v94, %v117
    %119 = vdwg.mxu0
    %v120 = vld [vmem:[%s4] sm:$0x1]
    %v122 = vperm.slane %v120, 0
    %v124 = vadd.f32 %v118, %v122
    %v125 = vmax.f32 %v124, 0.0
    %v126 = vld [vmem:[#allocation6] sm:$0xff]
    %v127 = vld [vmem:[#allocation6 + $0x8] sm:$0xff]
    %v128 = vld [vmem:[#allocation6 + $0x10] sm:$0xff]
    %v129 = vld [vmem:[#allocation6 + $0x18] sm:$0xff]
    %v130 = vld [vmem:[%s6] sm:$0x1]
    %v132 = vperm.slane %v130, 0
    %vm134 = vcmask 261120
    %v136 = vsel %vm134, %v125, 0
    %138 = vmatpush.msra.mxu0 0.0
    %139 = vmatpush.msra.mxu0 0.0
    %140 = vmatpush.msra.mxu0 0.0
    %141 = vmatpush.msra.mxu0 0.0
    %142 = vmatpush.msra.mxu0 0.0
    %143 = vmatpush.msra.mxu0 0.0
    %144 = vmatpush.msra.mxu0 0.0
    %145 = vmatpush.msra.mxu0 0.0
    %146 = vmatpush.msra.mxu0 0.0
    %147 = vmatpush.msra.mxu0 0.0
    %148 = vmatpush.msra.mxu0 0.0
    %149 = vmatpush.msra.mxu0 0.0
    %150 = vmatpush.msra.mxu0 %v129
    %151 = vmatpush.msra.mxu0 %v128
    %152 = vmatpush.msra.mxu0 %v127
    %153 = vmatpush.msra.mxu0 %v126
    %154 = vmatmul.f32.gmra.mxu0 %v136
    %v155 = vpop.f32.mrf.mxu0
    %v156 = vadd.f32 %v132, %v155
    %157 = vdwg.mxu0
    %v158 = vmax.f32 %v156, 0.0
    %v159 = vld [vmem:[%s7] sm:$0x1]
    %v161 = vperm.slane %v159, 0
    %v163 = vmul.f32 %v158, %v161
    %v164 = vsel %vm134, %v163, 0.0
    %165 = vadd.xlane.f32.xlu0 %v164
    %v166 = vpop.xlane.xlu0 %165
    %s167 = sld [smem:[#allocation2]]
    %v168 = vstv %s167
    %v169 = vadd.f32 %v166, %v168
    %v171 = vlaneseq
    %v172 = vand.u32 %v171, 127
    %v173 = vperm.slane %v169, %v172
    %vm175 = vcmask 57344
    %176 = vst.msk [vmem:[#allocation8] sm:$0x1] %vm175, %v173
    // Predicated region
    $region46: #{tpu_custom_call.1} parent=1 // pred_check
      _
    $region47: #{tpu_custom_call.1} parent=1 // pred_check_branch
      %178 = sbr.rel (0) target = $region49
    $region48: #{tpu_custom_call.1} parent=1 // pred_region
      %180 = vsyncadd [#allocation5], 0
      %s182 = sshll.u32 [#allocation8], 4
      %s183 = int_to_ptr.vmem [resolvable:$true] %s182
      %s184 = sshll.u32 %s9, 4
      %s185 = int_to_ptr.hbm [resolvable:$true] %s184
      %187 = dma.vmem_to_hbm [thread:$0]  %s183, 16, %s185, [#allocation5]
    $region49: #{tpu_custom_call.1} parent=1 // pred_fallthru
      _
    // Predicated region
    $region50: #{tpu_custom_call.1} parent=1 // pred_check
      _
    $region51: #{tpu_custom_call.1} parent=1 // pred_check_branch
      %189 = sbr.rel (0) target = $region53
    $region52: #{tpu_custom_call.1} parent=1 // pred_region
      %191 = dma.done [#allocation5], 16
    $region53: #{tpu_custom_call.1} parent=1 // pred_fallthru
      _
    %192 = vsyncpa [#allocation4], 1
    %193 = vsyncpa [#allocation7], 1
    %194 = vsyncpa [#allocation5], 1

</llo_original>
